<compile_context>
chip_gen: v7x
topology: tpu7x:2x2x1
jax: 0.10.0
libtpu: 0.0.40
codegen_flags: <defaults>
</compile_context>

<pallas_src>
import functools

import jax
import jax.numpy as jnp
from jax import lax
from jax.experimental import pallas as pl
from jax.experimental.pallas import tpu as pltpu


def _pos_encoding_kernel(denom_ref, o_ref, *, n_embd: int, pos_per_row: int,
                         tile_rows: int):
    """Writes one (tile_rows, W) tile of the table.

    pos_per_row == 1     : natural layout, output row == position, lane == column.
    pos_per_row == 128/D : flat lane-dense layout, each output row packs
                           pos_per_row consecutive positions (n_embd = D < 128,
                           D divides 128, hence a power of two).
    """
    R, W = o_ref.shape
    row0 = pl.program_id(0) * tile_rows
    row = lax.broadcasted_iota(jnp.int32, (R, 1), 0) + row0          # (R, 1)
    lane = lax.broadcasted_iota(jnp.int32, (1, W), 1)                # (1, W)

    if pos_per_row == 1:
        col = lane                                                   # (1, W)
        pos = row.astype(jnp.float32)                                # (R, 1)
    else:
        # n_embd is a power of two here, so div/mod by n_embd are bit ops.
        shift = n_embd.bit_length() - 1
        col = lane & (n_embd - 1)                                    # (1, W)
        posoff = lane >> shift                                       # (1, W)
        pos = (row * pos_per_row + posoff).astype(jnp.float32)       # (R, W)

    # angle = pos / 10000**(2i/n_embd); the denominator row is hoisted to the
    # wrapper (one pow pass total) and broadcast over the rows of this tile.
    angle = pos / denom_ref[...]
    is_cos = (col & 1) == 1
    o_ref[...] = jnp.where(is_cos, jnp.cos(angle), jnp.sin(angle))


def _pick_tile_rows(n_rows: int, row_bytes: int) -> int:
    """Row-tile size: multiple of 8, bytes-bounded, >=2 (even #) tiles if possible."""
    if n_rows <= 8:
        return n_rows                      # tiny table: single full-extent tile
    budget_per_buf = 16 * 1024 * 1024      # x2 (double-buffered) = 32 MiB of output VMEM
    tile = max(8, (budget_per_buf // max(row_bytes, 1)) // 8 * 8)
    # At least two row tiles so the "parallel" grid axis feeds both v7x TCs.
    half = ((n_rows + 1) // 2 + 7) // 8 * 8
    tile = min(tile, half)
    # Prefer an even tile count (a leftover odd tile idles one v7x TC).
    n_tiles = pl.cdiv(n_rows, tile)
    if n_tiles > 1 and n_tiles % 2 == 1:
        n_tiles += 1
        tile = max(8, (pl.cdiv(n_rows, n_tiles) + 7) // 8 * 8)
    return tile


def build_positional_encoding(valid_lens: int, n_embd: int) -> jax.Array:
    """Builds the [valid_lens, n_embd] float32 sinusoidal table with a Pallas kernel."""
    if n_embd % 2 != 0:
        raise ValueError("n_embd must be even (sin/cos column pairs)")
    if valid_lens >= (1 << 24):
        # Positions above 2**24 are not exactly representable in float32.
        raise ValueError("valid_lens too large for exact float32 positions")

    if n_embd < 128 and 128 % n_embd == 0:
        # Lane-dense flat layout: (rows, 128); each row packs 128//n_embd positions.
        pos_per_row = 128 // n_embd
        width = 128
    else:
        # Natural layout.  If n_embd % 128 != 0 stores are lane-masked but correct.
        # TODO(synk): a lane-dense layout for general n_embd (e.g. 96, 200) needs
        # per-element exponents; not worth it for an init-time table build.
        pos_per_row = 1
        width = n_embd

    padded_lens = pl.cdiv(valid_lens, pos_per_row) * pos_per_row
    n_rows = padded_lens // pos_per_row

    # Hoisted per-lane denominator row: 10000**(2i/n_embd), shared by each
    # sin/cos column pair (and repeated across packed positions when flat).
    col = jnp.arange(width, dtype=jnp.int32) % n_embd
    two_i = ((col // 2) * 2).astype(jnp.float32)
    denom = (10000.0 ** (two_i / jnp.float32(n_embd))).astype(jnp.float32)
    denom = denom.reshape(1, width)

    tile_rows = _pick_tile_rows(n_rows, width * 4)
    grid = (pl.cdiv(n_rows, tile_rows),)
    kernel = functools.partial(
        _pos_encoding_kernel,
        n_embd=n_embd, pos_per_row=pos_per_row, tile_rows=tile_rows)

    flat = pl.pallas_call(
        kernel,
        out_shape=jax.ShapeDtypeStruct((n_rows, width), jnp.float32),
        grid=grid,
        in_specs=[pl.BlockSpec((1, width), lambda i: (0, 0))],
        out_specs=pl.BlockSpec((tile_rows, width), lambda i: (i, 0)),
        compiler_params=pltpu.CompilerParams(
            dimension_semantics=("parallel",),
            vmem_limit_bytes=48 * 1024 * 1024,
        ),
    )(denom)

    if pos_per_row == 1:
        return flat
    enc = flat.reshape(padded_lens, n_embd)
    return enc[:valid_lens] if padded_lens != valid_lens else enc


class PositionalEmbedding:
    """JAX/Pallas port of the PyTorch module."""

    def __init__(self, n_embd: int, valid_lens: int):
        self.n_embd = n_embd
        self.valid_lens = valid_lens
        # Table is fixed (requires_grad_(False) in torch) -> build once at init.
        self.encoding = build_positional_encoding(valid_lens, n_embd)

    def __call__(self, x: jax.Array) -> jax.Array:
        seq_lens = x.shape[1]
        return self.encoding[:seq_lens, :]


def _reference_encoding(valid_lens: int, n_embd: int) -> jnp.ndarray:
    """Pure-JAX reference mirroring the torch __init__ exactly."""
    enc = jnp.zeros((valid_lens, n_embd), jnp.float32)
    pos = jnp.arange(0, valid_lens, dtype=jnp.float32)[:, None]
    _2i = jnp.arange(0, n_embd, 2, dtype=jnp.float32)
    enc = enc.at[:, 0::2].set(jnp.sin(pos / 10000 ** (_2i / n_embd)))
    enc = enc.at[:, 1::2].set(jnp.cos(pos / 10000 ** (_2i / n_embd)))
    return enc


if __name__ == "__main__":
    # Demo shapes implied by the module: (batch, seq, n_embd).
    n_embd = 32
    valid_lens = 16
    batch, seq = 2, 8

    key = jax.random.PRNGKey(0)
    x = jax.random.normal(key, (batch, seq, n_embd), dtype=jnp.float32)

    module = PositionalEmbedding(n_embd, valid_lens)
    out = jax.block_until_ready(module(x))

    assert out.shape == (seq, n_embd), out.shape
    assert out.dtype == jnp.float32, out.dtype

    ref = _reference_encoding(valid_lens, n_embd)[:seq, :]
    assert jnp.allclose(out, ref, atol=2e-5, rtol=1e-5), "mismatch vs reference"

    # Multi-tile + partial last tile + n_embd % 128 == 0 (lane-dense natural layout).
    big_L, big_D = 1000, 128
    big = jax.block_until_ready(build_positional_encoding(big_L, big_D))
    big_ref = _reference_encoding(big_L, big_D)
    # Strict where the comparison is well-conditioned (small positions/angles).
    assert jnp.allclose(big[:64], big_ref[:64], atol=5e-5, rtol=1e-5), "mismatch (tiled, head)"
    # Large positions: sin/cos at arguments ~1e3 are sensitive to 1-ulp argument
    # and range-reduction differences between the in-kernel and XLA
    # implementations, so use a tolerance appropriate for that conditioning.
    assert jnp.allclose(big, big_ref, atol=5e-4, rtol=1e-5), "mismatch (tiled, full)"

    # Fallback path: n_embd neither a multiple nor a divisor of 128 (masked stores).
    odd = jax.block_until_ready(build_positional_encoding(64, 96))
    odd_ref = _reference_encoding(64, 96)
    assert jnp.allclose(odd, odd_ref, atol=5e-5, rtol=1e-5), "mismatch (fallback layout)"

    print("KERNEL_OK")
</pallas_src>

<mosaic_0001>
module attributes {stable_mosaic.version = 11 : i64} {
  func.func @_pos_encoding_kernel(%arg0: i32, %arg1: memref<1x128xf32, #tpu.memory_space<vmem>>, %arg2: memref<4x128xf32, #tpu.memory_space<vmem>>) attributes {dimension_semantics = [#tpu.dimension_semantics<parallel>], iteration_bounds = array<i64: 1>, scalar_prefetch = 0 : i64, scratch_operands = 0 : i64, tpu.core_type = #tpu.core_type<tc>, window_params = [{pipeline_mode = #tpu.pipeline_mode<synchronous>, transform_indices = @transform_0, window_bounds = array<i64: 1, 128>}, {transform_indices = @transform_1, window_bounds = array<i64: 4, 128>}]} {
    %c4_i32 = arith.constant 4 : i32
    %0 = arith.muli %arg0, %c4_i32 : i32
    %1 = tpu.iota {dimensions = array<i32: 0>} : vector<4x1xi32>
    %2 = vector.broadcast %0 : i32 to vector<4x1xi32>
    %3 = arith.addi %1, %2 : vector<4x1xi32>
    %4 = tpu.iota {dimensions = array<i32: 1>} : vector<1x128xi32>
    %c31_i32 = arith.constant 31 : i32
    %5 = vector.broadcast %c31_i32 : i32 to vector<1x128xi32>
    %6 = arith.andi %4, %5 : vector<1x128xi32>
    %c5_i32 = arith.constant 5 : i32
    %7 = vector.broadcast %c5_i32 : i32 to vector<1x128xi32>
    %8 = arith.shrsi %4, %7 : vector<1x128xi32>
    %c4_i32_0 = arith.constant 4 : i32
    %9 = vector.broadcast %c4_i32_0 : i32 to vector<4x1xi32>
    %10 = arith.muli %3, %9 : vector<4x1xi32>
    %11 = vector.broadcast %10 : vector<4x1xi32> to vector<4x128xi32>
    %12 = vector.broadcast %8 : vector<1x128xi32> to vector<4x128xi32>
    %13 = arith.addi %11, %12 : vector<4x128xi32>
    %14 = arith.sitofp %13 : vector<4x128xi32> to vector<4x128xf32>
    %c0 = arith.constant 0 : index
    %c0_1 = arith.constant 0 : index
    %15 = vector.load %arg1[%c0, %c0_1] : memref<1x128xf32, #tpu.memory_space<vmem>>, vector<1x128xf32>
    %16 = vector.broadcast %15 : vector<1x128xf32> to vector<4x128xf32>
    %17 = arith.divf %14, %16 : vector<4x128xf32>
    %c1_i32 = arith.constant 1 : i32
    %18 = vector.broadcast %c1_i32 : i32 to vector<1x128xi32>
    %19 = arith.andi %6, %18 : vector<1x128xi32>
    %c1_i32_2 = arith.constant 1 : i32
    %20 = vector.broadcast %c1_i32_2 : i32 to vector<1x128xi32>
    %21 = arith.cmpi eq, %19, %20 : vector<1x128xi32>
    %22 = math.cos %17 : vector<4x128xf32>
    %23 = math.sin %17 : vector<4x128xf32>
    %24 = vector.shape_cast %21 : vector<1x128xi1> to vector<1x128xi1>
    %25 = vector.broadcast %24 : vector<1x128xi1> to vector<4x128xi1>
    %26 = arith.select %25, %22, %23 : vector<4x128xi1>, vector<4x128xf32>
    %c0_3 = arith.constant 0 : index
    %c0_4 = arith.constant 0 : index
    %27 = vector.load %arg2[%c0_3, %c0_4] : memref<4x128xf32, #tpu.memory_space<vmem>>, vector<4x128xf32>
    tpu.vector_store %arg2[%c0_3, %c0_4], %26 {strides = array<i32>} : memref<4x128xf32, #tpu.memory_space<vmem>>, vector<4x128xf32>,
    return
  }
  func.func @transform_0(%arg0: i32) -> (i32, i32) {
    %c0_i32 = arith.constant 0 : i32
    %c0_i32_0 = arith.constant 0 : i32
    %c0_i32_1 = arith.constant 0 : i32
    return %c0_i32, %c0_i32_0 : i32, i32
  }
  func.func @transform_1(%arg0: i32) -> (i32, i32) {
    %c0_i32 = arith.constant 0 : i32
    %c0_i32_0 = arith.constant 0 : i32
    return %arg0, %c0_i32 : i32, i32
  }
}

</mosaic_0001>

<llo_original>
// kernel: tpu_custom_call.1
$region0: #{tpu_custom_call.1}
  #allocation0 [shape = 'u32[]', space=smem, size = 0x4, offset = 0x4, fixed_abs, tag = 'smem constant byte address 0x4 - core index']
  #allocation1 [shape = 'u32[144,128]{1,0:T(1,128)}', space=vmem, size = 0x12000, scoped, tag = 'internal scratch']
  %s0 = inlined_call_operand.hbm [shape: f32[1,128], index: 0, kind: input, shape index: {}]
  %s1 = inlined_call_operand.hbm [shape: f32[4,128], index: 1, kind: output, shape index: {}]
  %s2 = sld [smem:[#allocation0]]
  $region18: #{tpu_custom_call.1} parent=0
    _
  %s4 = ssub.s32 1, %s2
  %s5 = scalar_select 0, %s4, %s2
  $region1: #{tpu_custom_call.1} parent=0
    #allocation2 [shape = 'u8[512]{0}', space=vmem, size = 0x400, scoped, tag = 'input window, operand 0, single buffered']
    #allocation3 [shape = 's32[1]{0}', space=sflag, size = 0x4, scoped, tag = 'scoped memory for tpu_custom_call.1']
    #allocation4 [shape = 's32[1]{0}', space=sflag, size = 0x4, scoped, tag = 'scoped memory for tpu_custom_call.1']
    #allocation5 [shape = 'u8[2048]{0}', space=vmem, size = 0x800, scoped, tag = 'output window, operand 0, single buffered']
    %6 = vsyncpa [#allocation3], 0
    %7 = vsyncpa [#allocation4], 0
    // Predicated region
    $region2: #{tpu_custom_call.1} parent=1 // pred_check
      _
    $region3: #{tpu_custom_call.1} parent=1 // pred_check_branch
      %9 = sbr.rel (0) target = $region5
    $region4: #{tpu_custom_call.1} parent=1 // pred_region
      %s11 = ssub.s32 16, 16
      %12 = vsyncadd [#allocation3], %s11
      %s14 = sshll.u32 [#allocation2], 4
      %s15 = int_to_ptr.vmem [resolvable:$true] %s14
      %17 = dma.hbm_to_vmem [thread:$0]  %s0, 16, %s15, [#allocation3]
    $region5: #{tpu_custom_call.1} parent=1 // pred_fallthru
      _
    // Predicated region
    $region6: #{tpu_custom_call.1} parent=1 // pred_check
      _
    $region7: #{tpu_custom_call.1} parent=1 // pred_check_branch
      %19 = sbr.rel (0) target = $region9
    $region8: #{tpu_custom_call.1} parent=1 // pred_region
      %20 = dma.done [#allocation3], 16
    $region9: #{tpu_custom_call.1} parent=1 // pred_fallthru
      _
    %s21 = smul.u32 0, 4
    %v22 = vlaneseq
    %v23 = vshrl.u32 %v22, 7
    %v24 = vstv %s21
    %v25 = vadd.s32 %v23, %v24
    %v26 = vlaneseq
    %v27 = vand.u32 %v26, 127
    %v28 = vand.u32 %v27, 31
    %v29 = vshra.s32 %v27, 5
    %v30 = vmul.u32 %v25, 4
    %v31 = vadd.s32 %v30, %v29
    %v32 = vcvt.s32.f32 %v31
    %v33 = vld [vmem:[#allocation2] sm:$0x1]
    %v35 = vlaneseq
    %v36 = vshrl.u32 %v35, 7
    %v37 = vsub.s32 0, %v36
    %v38 = vrot.slane %v33, %v37
    %v40 = vrcp.pop %v38
    %v41 = vmul.f32 %v32, %v40
    %v42 = vand.u32 %v28, 1
    %vm43 = vcmp.eq.s32.totalorder %v42, 1
    %v44 = vand.u32 2147483647, %v41
    %vm45 = vcmp.le.f32.partialorder %v44, 0.7853982
    %vm46 = vcmp.lt.s32.totalorder %v41, 0
    %v47 = vand.u32 %v41, 2139095040
    %v48 = vshrl.u32 %v47, 23
    %v49 = vsub.s32 %v48, 127
    %v50 = vand.u32 2147483647, %v41
    %v51 = vand.u32 %v50, 8388607
    %v52 = vor.u32 %v51, 8388608
    %v53 = vsub.s32 0, %v52
    %v54 = vadd.s32 %v49, 1
    %vm55 = vcmp.gt.s32.totalorder %v54, 0
    %v56 = vsel %vm55, %v54, 0
    %v57 = vshrl.u32 %v56, 5
    %v58 = vand.u32 %v56, 31
    %v59 = vsub.s32 32, %v58
    %v60 = vshrl.u32 683565275, %v59
    %v61 = vshll.u32 683565275, %v58
    %v62 = vshrl.u32 2475754826, %v59
    %v63 = vor.u32 %v61, %v62
    %v64 = vshll.u32 2475754826, %v58
    %v65 = vshrl.u32 2131351028, %v59
    %v66 = vor.u32 %v64, %v65
    %v67 = vshll.u32 2131351028, %v58
    %v68 = vshrl.u32 2102212464, %v59
    %v69 = vor.u32 %v67, %v68
    %v70 = vshll.u32 2102212464, %v58
    %v71 = vshrl.u32 920167782, %v59
    %v72 = vor.u32 %v70, %v71
    %v73 = vshll.u32 920167782, %v58
    %v74 = vshrl.u32 1326507024, %v59
    %v75 = vor.u32 %v73, %v74
    %vm76 = vcmp.lt.s32.totalorder %v57, 1
    %vm77 = vcmp.lt.s32.totalorder %v57, 2
    %vm78 = vcmp.lt.s32.totalorder %v57, 3
    %vm79 = vcmp.lt.s32.totalorder %v57, 4
    %v80 = vsel %vm76, %v60, %v63
    %v81 = vsel %vm79, %v69, 2102212464
    %v82 = vsel %vm78, %v66, %v81
    %v83 = vsel %vm77, %v80, %v82
    %v84 = vsel %vm76, %v63, %v66
    %v85 = vsel %vm79, %v72, 920167782
    %v86 = vsel %vm78, %v69, %v85
    %v87 = vsel %vm77, %v84, %v86
    %v88 = vsel %vm76, %v66, %v69
    %v89 = vsel %vm79, %v75, 1326507024
    %v90 = vsel %vm78, %v72, %v89
    %v91 = vsel %vm77, %v88, %v90
    %v92 = vshll.u32 %v52, 8
    %v93 = vmul.u32.u64.compose %v92, %v91
    %v94 = vextract.low.u32 %v93
    %v95 = vextract.high.u32 %v93
    %v96 = vmul.u32.u64.compose %v92, %v87
    %v97 = vextract.low.u32 %v96
    %v98 = vextract.high.u32 %v96
    %v99 = vmul.u32 %v92, %v83
    %v100 = vadd.s32 %v95, %v97
    %vm101 = vc.u32 %v95, %v97
    %v102 = vadd.s32 %v98, 1
    %v103 = vsel %vm101, %v102, %v98
    %v104 = vadd.s32 %v99, %v103
    %v105 = vadd.s32 %v104, 536870912
    %v106 = vshrl.u32 %v105, 30
    %v107 = vshll.u32 %v106, 30
    %v108 = vsub.s32 %v104, %v107
    %vm109 = vcmp.lt.s32.totalorder %v108, 0
    %v110 = vsub.s32 0, %v108
    %v111 = vsel %vm109, %v110, %v108
    %v112 = vclz %v111
    %v113 = vsub.s32 %v112, 2
    %vm114 = vcmp.gt.s32.totalorder 0, %v113
    %v115 = vsel %vm114, 0, %v113
    %v116 = vsub.s32 32, %v115
    %v117 = vshll.u32 %v108, %v115
    %v118 = vshrl.u32 %v100, %v116
    %v119 = vor.u32 %v117, %v118
    %v120 = vsub.s32 4294967266, %v115
    %v121 = vadd.s32 %v120, 127
    %v122 = vshll.u32 %v121, 23
    %v123 = vor.u32 4788187, %v122
    %v124 = vand.u32 2147483647, %v123
    %v126 = vcvt.s32.f32 %v119
    %v127 = vmul.f32 %v126, %v124
    %v128 = vxor.u32 %v127, 2147483648
    %v129 = vsel %vm46, %v128, %v127
    %v130 = vsub.s32 4, %v106
    %v131 = vsel %vm46, %v130, %v106
    %v132 = vsel %vm45, %v41, %v129
    %v133 = vsel %vm45, 0, %v131
    %v134 = vcosq.f32.pop %v132
    %v135 = vsinq.f32.pop %v132
    %vm136 = vweird.f32 %v41
    %v137 = vand.u32 %v133, 3
    %vm138 = vcmp.lt.s32.totalorder %v137, 2
    %vm139 = vcmp.eq.s32.totalorder %v137, 0
    %v140 = vxor.u32 %v135, 2147483648
    %v141 = vsel %vm139, %v134, %v140
    %vm142 = vcmp.eq.s32.totalorder %v137, 2
    %v143 = vxor.u32 %v134, 2147483648
    %v144 = vsel %vm142, %v143, %v135
    %v145 = vsel %vm138, %v141, %v144
    %v146 = vsel %vm136, nan, %v145
    %v147 = vand.u32 2147483647, %v41
    %vm148 = vcmp.le.f32.partialorder %v147, 0.7853982
    %vm149 = vcmp.lt.s32.totalorder %v41, 0
    %v150 = vand.u32 %v41, 2139095040
    %v151 = vshrl.u32 %v150, 23
    %v152 = vsub.s32 %v151, 127
    %v153 = vand.u32 2147483647, %v41
    %v154 = vand.u32 %v153, 8388607
    %v155 = vor.u32 %v154, 8388608
    %v156 = vsub.s32 0, %v155
    %v157 = vadd.s32 %v152, 1
    %vm158 = vcmp.gt.s32.totalorder %v157, 0
    %v159 = vsel %vm158, %v157, 0
    %v160 = vshrl.u32 %v159, 5
    %v161 = vand.u32 %v159, 31
    %v162 = vsub.s32 32, %v161
    %v163 = vshrl.u32 683565275, %v162
    %v164 = vshll.u32 683565275, %v161
    %v165 = vshrl.u32 2475754826, %v162
    %v166 = vor.u32 %v164, %v165
    %v167 = vshll.u32 2475754826, %v161
    %v168 = vshrl.u32 2131351028, %v162
    %v169 = vor.u32 %v167, %v168
    %v170 = vshll.u32 2131351028, %v161
    %v171 = vshrl.u32 2102212464, %v162
    %v172 = vor.u32 %v170, %v171
    %v173 = vshll.u32 2102212464, %v161
    %v174 = vshrl.u32 920167782, %v162
    %v175 = vor.u32 %v173, %v174
    %v176 = vshll.u32 920167782, %v161
    %v177 = vshrl.u32 1326507024, %v162
    %v178 = vor.u32 %v176, %v177
    %vm179 = vcmp.lt.s32.totalorder %v160, 1
    %vm180 = vcmp.lt.s32.totalorder %v160, 2
    %vm181 = vcmp.lt.s32.totalorder %v160, 3
    %vm182 = vcmp.lt.s32.totalorder %v160, 4
    %v183 = vsel %vm179, %v163, %v166
    %v184 = vsel %vm182, %v172, 2102212464
    %v185 = vsel %vm181, %v169, %v184
    %v186 = vsel %vm180, %v183, %v185
    %v187 = vsel %vm179, %v166, %v169
    %v188 = vsel %vm182, %v175, 920167782
    %v189 = vsel %vm181, %v172, %v188
    %v190 = vsel %vm180, %v187, %v189
    %v191 = vsel %vm179, %v169, %v172
    %v192 = vsel %vm182, %v178, 1326507024
    %v193 = vsel %vm181, %v175, %v192
    %v194 = vsel %vm180, %v191, %v193
    %v195 = vshll.u32 %v155, 8
    %v196 = vmul.u32.u64.compose %v195, %v194
    %v197 = vextract.low.u32 %v196
    %v198 = vextract.high.u32 %v196
    %v199 = vmul.u32.u64.compose %v195, %v190
    %v200 = vextract.low.u32 %v199
    %v201 = vextract.high.u32 %v199
    %v202 = vmul.u32 %v195, %v186
    %v203 = vadd.s32 %v198, %v200
    %vm204 = vc.u32 %v198, %v200
    %v205 = vadd.s32 %v201, 1
    %v206 = vsel %vm204, %v205, %v201
    %v207 = vadd.s32 %v202, %v206
    %v208 = vadd.s32 %v207, 536870912
    %v209 = vshrl.u32 %v208, 30
    %v210 = vshll.u32 %v209, 30
    %v211 = vsub.s32 %v207, %v210
    %vm212 = vcmp.lt.s32.totalorder %v211, 0
    %v213 = vsub.s32 0, %v211
    %v214 = vsel %vm212, %v213, %v211
    %v215 = vclz %v214
    %v216 = vsub.s32 %v215, 2
    %vm217 = vcmp.gt.s32.totalorder 0, %v216
    %v218 = vsel %vm217, 0, %v216
    %v219 = vsub.s32 32, %v218
    %v220 = vshll.u32 %v211, %v218
    %v221 = vshrl.u32 %v203, %v219
    %v222 = vor.u32 %v220, %v221
    %v223 = vsub.s32 4294967266, %v218
    %v224 = vadd.s32 %v223, 127
    %v225 = vshll.u32 %v224, 23
    %v226 = vor.u32 4788187, %v225
    %v227 = vand.u32 2147483647, %v226
    %v229 = vcvt.s32.f32 %v222
    %v230 = vmul.f32 %v229, %v227
    %v231 = vxor.u32 %v230, 2147483648
    %v232 = vsel %vm149, %v231, %v230
    %v233 = vsub.s32 4, %v209
    %v234 = vsel %vm149, %v233, %v209
    %v235 = vsel %vm148, %v41, %v232
    %v236 = vsel %vm148, 0, %v234
    %v237 = vcosq.f32.pop %v235
    %v238 = vsinq.f32.pop %v235
    %vm239 = vweird.f32 %v41
    %v240 = vadd.s32 %v236, 3
    %v241 = vand.u32 %v240, 3
    %vm242 = vcmp.lt.s32.totalorder %v241, 2
    %vm243 = vcmp.eq.s32.totalorder %v241, 0
    %v244 = vxor.u32 %v238, 2147483648
    %v245 = vsel %vm243, %v237, %v244
    %vm246 = vcmp.eq.s32.totalorder %v241, 2
    %v247 = vxor.u32 %v237, 2147483648
    %v248 = vsel %vm246, %v247, %v238
    %v249 = vsel %vm242, %v245, %v248
    %v250 = vsel %vm239, nan, %v249
    %v251 = vsel %vm43, 1, 0
    %vm252 = vcmp.eq.s32.totalorder %v251, 1
    %v253 = vsel %vm252, %v146, %v250
    %254 = vst [vmem:[#allocation5] sm:$0xf] %v253
    // Predicated region
    $region10: #{tpu_custom_call.1} parent=1 // pred_check
      _
    $region11: #{tpu_custom_call.1} parent=1 // pred_check_branch
      %256 = sbr.rel (0) target = $region13
    $region12: #{tpu_custom_call.1} parent=1 // pred_region
      %s258 = ssub.s32 64, 64
      %259 = vsyncadd [#allocation4], %s258
      %s261 = sshll.u32 [#allocation5], 4
      %s262 = int_to_ptr.vmem [resolvable:$true] %s261
      %264 = dma.vmem_to_hbm [thread:$0]  %s262, 64, %s1, [#allocation4]
    $region13: #{tpu_custom_call.1} parent=1 // pred_fallthru
      _
    // Predicated region
    $region14: #{tpu_custom_call.1} parent=1 // pred_check
      _
    $region15: #{tpu_custom_call.1} parent=1 // pred_check_branch
      %266 = sbr.rel (0) target = $region17
    $region16: #{tpu_custom_call.1} parent=1 // pred_region
      %267 = dma.done [#allocation4], 64
    $region17: #{tpu_custom_call.1} parent=1 // pred_fallthru
      _
    %268 = vsyncpa [#allocation3], 1
    %269 = vsyncpa [#allocation4], 1

</llo_original>
